<compile_context>
chip_gen: v5e
topology: v5e:2x2
jax: 0.10.0
libtpu: 0.0.40
codegen_flags: <defaults>
</compile_context>

<pallas_src>
import functools
import math

import jax
import jax.numpy as jnp
from jax.experimental import pallas as pl
from jax.experimental.pallas import tpu as pltpu


_MIN_PALLAS_OUT_BYTES = 32 * 1024         # below this, plain XLA concat wins
_TARGET_BLOCK_BYTES = 8 * 1024 * 1024     # budget for 2x(in+out) double-buffered blocks
_MIN_BLOCK_BYTES = 512 * 1024             # don't shrink blocks below this just to add steps
_FLAT_PATH_CAP_BYTES = 24 * 1024 * 1024   # if the minimal legal flat block exceeds this -> token tiling


def _cdiv(a, b):
    return (a + b - 1) // b


# --------------------------- flat (lane-dense) path ---------------------------

def _cls_flat_kernel(x_ref, w_ref, o_ref):
    # x_ref: (Bt, T*D), w_ref: (1, D), o_ref: (Bt, (T+1)*D)
    bt = x_ref.shape[0]
    in_row = x_ref.shape[1]
    d = w_ref.shape[1]
    # Two direct stores: bulk x copy lowers to a straight VMEM copy; any masking
    # (when T*D is not lane-aligned) is confined to the tiny D-wide CLS tail.
    o_ref[:, :in_row] = x_ref[...]
    o_ref[:, in_row:] = jnp.broadcast_to(w_ref[...], (bt, d)).astype(o_ref.dtype)


def _pick_flat_bt(b, row_bytes, sub_align):
    """Pick the batch-tile row count for the flattened path."""
    bt = max(1, _TARGET_BLOCK_BYTES // (2 * row_bytes))       # VMEM budget ceiling
    if b >= 2:
        bt = min(bt, max(1, b // 2))                          # >= 2 grid steps (pipeline + v7x 2 TCs)
    bt_8 = max(1, b // 8)
    if b >= 16 and bt_8 * row_bytes >= _MIN_BLOCK_BYTES:
        bt = min(bt, bt_8)                                    # >= 8 steps when blocks stay >= ~0.5 MiB
    bt = min(bt, b)
    # Layout-legal, dtype-aware sublane rounding.
    if bt == b:
        return bt
    if bt >= sub_align:
        return (bt // sub_align) * sub_align
    if bt >= 8:
        return (bt // 8) * 8
    return min(b, 8)   # can't legally tile below 8 rows when b > bt


# ------------------------ token-axis tiled path (huge rows) ------------------------

def _cls_token_tiled_kernel(x_ref, w_ref, o_ref, *, cls_block, cls_off):
    # x_ref/o_ref: (Bt, tt, D), w_ref: (1, D). The [CLS] slot (token index T of the
    # output) lives in output token-block `cls_block` at local offset `cls_off`.
    bt = o_ref.shape[0]
    d = o_ref.shape[2]
    j = pl.program_id(1)

    @pl.when(j != cls_block)
    def _():
        o_ref[...] = x_ref[...]

    @pl.when(j == cls_block)
    def _():
        if cls_off > 0:   # static
            o_ref[:, :cls_off, :] = x_ref[:, :cls_off, :]
        o_ref[:, cls_off:cls_off + 1, :] = jnp.broadcast_to(
            w_ref[...].reshape(1, 1, d), (bt, 1, d)).astype(o_ref.dtype)


# ----------------------------------- wrapper -----------------------------------

def cls_token_forward(x: jax.Array, weight: jax.Array, *,
                      use_pallas=None, force_path=None, token_tile=None) -> jax.Array:
    """Append the learned [CLS] token to the end of each item's token axis.

    x: (B, T, D), weight: (D,)  ->  (B, T+1, D)
    """
    b, t, d = x.shape
    assert weight.shape == (d,)
    assert t >= 1
    dtype = x.dtype
    itemsize = jnp.dtype(dtype).itemsize
    w = weight.astype(dtype)

    out_bytes = b * (t + 1) * d * itemsize
    if use_pallas is None:
        use_pallas = out_bytes >= _MIN_PALLAS_OUT_BYTES
    if not use_pallas:
        # Tiny input: pallas_call launch/grid overhead dominates; let XLA copy.
        return jnp.concatenate(
            [x, jnp.broadcast_to(w.reshape(1, 1, d), (b, 1, d))], axis=1)

    sub_align = 8 * max(1, 4 // itemsize)      # 8 rows f32, 16 bf16, 32 int8/fp8
    in_row, out_row = t * d, (t + 1) * d
    row_bytes = (in_row + out_row) * itemsize

    if force_path is None:
        # Flattened path needs >= min(b, 8) rows per block to be layout-legal;
        # route to token-axis tiling if that would blow the VMEM budget (v7x: 64 MiB).
        path = "flat" if 2 * min(b, 8) * row_bytes <= _FLAT_PATH_CAP_BYTES else "tokens"
    elif force_path in ("flat", "tokens"):
        path = force_path
    else:
        raise ValueError("force_path must be None, 'flat' or 'tokens'")

    if path == "flat":
        bt = _pick_flat_bt(b, row_bytes, sub_align)
        grid = (_cdiv(b, bt),)
        vmem_limit = max(2 * bt * row_bytes + (2 << 20), 8 << 20)
        out_flat = pl.pallas_call(
            _cls_flat_kernel,
            out_shape=jax.ShapeDtypeStruct((b, out_row), dtype),
            grid_spec=pltpu.PrefetchScalarGridSpec(
                num_scalar_prefetch=0,
                grid=grid,
                in_specs=[
                    pl.BlockSpec((bt, in_row), lambda i: (i, 0)),
                    pl.BlockSpec((1, d), lambda i: (0, 0)),   # resident CLS vector
                ],
                out_specs=pl.BlockSpec((bt, out_row), lambda i: (i, 0)),
            ),
            compiler_params=pltpu.CompilerParams(
                dimension_semantics=("parallel",),
                vmem_limit_bytes=int(vmem_limit),
            ),
        )(x.reshape(b, in_row), w.reshape(1, d))
        return out_flat.reshape(b, t + 1, d)

    # ----- token-axis tiled path -----
    bt3 = b if b < 8 else 8
    if token_tile is None:
        tt = _TARGET_BLOCK_BYTES // (4 * bt3 * d * itemsize)
    else:
        tt = token_tile
    tt = max(8, (min(tt, t) // 8) * 8)
    # TODO(synk): also tile the feature axis D if a single (8, 8, D) block ever
    # exceeds the VMEM budget (needs D > ~2M f32 elements).
    cls_block = t // tt            # output token-block containing the [CLS] slot
    cls_off = t % tt               # local token offset of the [CLS] slot (static)
    ntt_in = _cdiv(t, tt)
    ntt_out = _cdiv(t + 1, tt)
    grid = (_cdiv(b, bt3), ntt_out)
    vmem_limit = max(4 * bt3 * tt * d * itemsize + (2 << 20), 8 << 20)
    kernel = functools.partial(_cls_token_tiled_kernel,
                               cls_block=cls_block, cls_off=cls_off)
    return pl.pallas_call(
        kernel,
        out_shape=jax.ShapeDtypeStruct((b, t + 1, d), dtype),
        grid_spec=pltpu.PrefetchScalarGridSpec(
            num_scalar_prefetch=0,
            grid=grid,
            in_specs=[
                # Clamp the token-block index so the extra CLS-only grid step
                # (when tt | T) never requests a fully out-of-bounds x block.
                pl.BlockSpec((bt3, tt, d),
                             lambda i, j: (i, jnp.minimum(j, ntt_in - 1), 0)),
                pl.BlockSpec((1, d), lambda i, j: (0, 0)),
            ],
            out_specs=pl.BlockSpec((bt3, tt, d), lambda i, j: (i, j, 0)),
        ),
        compiler_params=pltpu.CompilerParams(
            dimension_semantics=("parallel", "parallel"),
            vmem_limit_bytes=int(vmem_limit),
        ),
    )(x, w.reshape(1, d))


def make_cls_token_weight(key, d_token: int, initialization: str = "uniform",
                          dtype=jnp.float32) -> jax.Array:
    """Deterministic equivalent of _TokenInitialization.apply on a (d_token,) param."""
    d_sqrt_inv = 1.0 / math.sqrt(d_token)
    if initialization == "uniform":
        return jax.random.uniform(key, (d_token,), dtype=dtype,
                                  minval=-d_sqrt_inv, maxval=d_sqrt_inv)
    if initialization == "normal":
        return d_sqrt_inv * jax.random.normal(key, (d_token,), dtype=dtype)
    raise ValueError("initialization must be one of ['uniform', 'normal']")


def _reference(x, w):
    b, _, d = x.shape
    return jnp.concatenate(
        [x, jnp.broadcast_to(w.reshape(1, 1, d).astype(x.dtype), (b, 1, d))], axis=1)


if __name__ == "__main__":
    key = jax.random.PRNGKey(0)

    cases = [
        # (shape, dtype, kwargs, label)
        ((2, 8, 32), jnp.float32, dict(), "tiny -> XLA fallback"),
        ((16, 12, 64), jnp.float32, dict(use_pallas=True), "flat lane-dense f32"),
        ((16, 12, 64), jnp.bfloat16, dict(use_pallas=True), "flat lane-dense bf16"),
        ((8, 20, 128), jnp.float32,
         dict(use_pallas=True, force_path="tokens", token_tile=8), "token-axis tiled"),
    ]

    for shape, dtype, kwargs, label in cases:
        b, t, d = shape
        key, kx, kw = jax.random.split(key, 3)
        x = jax.random.normal(kx, shape, dtype=jnp.float32).astype(dtype)
        w = make_cls_token_weight(kw, d, "uniform").astype(dtype)

        y = jax.block_until_ready(cls_token_forward(x, w, **kwargs))
        ref = _reference(x, w)

        assert y.shape == (b, t + 1, d), label
        assert jnp.array_equal(y, ref), f"mismatch vs reference: {label}"
        assert jnp.array_equal(y[:, -1, :], jnp.broadcast_to(w, (b, d))), label

    print("KERNEL_OK")
</pallas_src>

<mosaic_0001>
module attributes {stable_mosaic.version = 11 : i64} {
  func.func @_cls_flat_kernel(%arg0: i32, %arg1: memref<8x768xf32, #tpu.memory_space<vmem>>, %arg2: memref<1x64xf32, #tpu.memory_space<vmem>>, %arg3: memref<8x832xf32, #tpu.memory_space<vmem>>) attributes {dimension_semantics = [#tpu.dimension_semantics<parallel>], iteration_bounds = array<i64: 2>, scalar_prefetch = 0 : i64, scratch_operands = 0 : i64, tpu.core_type = #tpu.core_type<tc>, window_params = [{transform_indices = @transform_0, window_bounds = array<i64: 8, 768>}, {pipeline_mode = #tpu.pipeline_mode<synchronous>, transform_indices = @transform_1, window_bounds = array<i64: 1, 64>}, {transform_indices = @transform_2, window_bounds = array<i64: 8, 832>}]} {
    %c0 = arith.constant 0 : index
    %c0_0 = arith.constant 0 : index
    %0 = vector.load %arg1[%c0, %c0_0] : memref<8x768xf32, #tpu.memory_space<vmem>>, vector<8x768xf32>
    %c0_1 = arith.constant 0 : index
    %c0_2 = arith.constant 0 : index
    %1 = vector.load %arg3[%c0_1, %c0_2] : memref<8x832xf32, #tpu.memory_space<vmem>>, vector<8x768xf32>
    tpu.vector_store %arg3[%c0_1, %c0_2], %0 {strides = array<i32>} : memref<8x832xf32, #tpu.memory_space<vmem>>, vector<8x768xf32>,
    %c0_3 = arith.constant 0 : index
    %c0_4 = arith.constant 0 : index
    %2 = vector.load %arg2[%c0_3, %c0_4] : memref<1x64xf32, #tpu.memory_space<vmem>>, vector<1x64xf32>
    %3 = vector.shape_cast %2 : vector<1x64xf32> to vector<1x64xf32>
    %4 = vector.broadcast %3 : vector<1x64xf32> to vector<8x64xf32>
    %c0_5 = arith.constant 0 : index
    %c768 = arith.constant 768 : index
    %5 = vector.load %arg3[%c0_5, %c768] : memref<8x832xf32, #tpu.memory_space<vmem>>, vector<8x64xf32>
    tpu.vector_store %arg3[%c0_5, %c768], %4 {strides = array<i32>} : memref<8x832xf32, #tpu.memory_space<vmem>>, vector<8x64xf32>,
    return
  }
  func.func @transform_0(%arg0: i32) -> (i32, i32) {
    %c0_i32 = arith.constant 0 : i32
    %c0_i32_0 = arith.constant 0 : i32
    return %arg0, %c0_i32 : i32, i32
  }
  func.func @transform_1(%arg0: i32) -> (i32, i32) {
    %c0_i32 = arith.constant 0 : i32
    %c0_i32_0 = arith.constant 0 : i32
    %c0_i32_1 = arith.constant 0 : i32
    return %c0_i32, %c0_i32_0 : i32, i32
  }
  func.func @transform_2(%arg0: i32) -> (i32, i32) {
    %c0_i32 = arith.constant 0 : i32
    %c0_i32_0 = arith.constant 0 : i32
    return %arg0, %c0_i32 : i32, i32
  }
}

</mosaic_0001>

<llo_original>
// kernel: tpu_custom_call.1
$region0: #{tpu_custom_call.1}
  #allocation0 [shape = 'u32[]', space=smem, size = 0x4, offset = 0x4, fixed_abs, tag = 'smem constant byte address 0x4 - core index']
  #allocation1 [shape = 'u32[72,128]{1,0:T(1,128)}', space=vmem, size = 0x9000, scoped, tag = 'internal scratch']
  %s0 = inlined_call_operand.hbm [shape: f32[16,768], index: 0, kind: input, shape index: {}]
  %s1 = inlined_call_operand.hbm [shape: f32[1,64], index: 1, kind: input, shape index: {}]
  %s2 = inlined_call_operand.hbm [shape: f32[16,832], index: 2, kind: output, shape index: {}]
  %s3 = sld [smem:[#allocation0]]
  $region49: #{tpu_custom_call.1} parent=0
    _
  %s5 = ssub.s32 1, %s3
  %s6 = scalar_select 0, %s5, %s3
  $region1: #{tpu_custom_call.1} parent=0
    #allocation2 [shape = 'u8[49152]{0}', space=vmem, size = 0xc000, scoped, tag = 'input window, operand 0']
    #allocation3 [shape = 's32[2]{0}', space=sflag, size = 0x8, scoped, tag = 'scoped memory for tpu_custom_call.1']
    #allocation4 [shape = 's32[2]{0}', space=sflag, size = 0x8, scoped, tag = 'scoped memory for tpu_custom_call.1']
    #allocation5 [shape = 'u8[512]{0}', space=vmem, size = 0x400, scoped, tag = 'input window, operand 1, single buffered']
    #allocation6 [shape = 's32[1]{0}', space=sflag, size = 0x4, scoped, tag = 'scoped memory for tpu_custom_call.1']
    #allocation7 [shape = 'u8[57344]{0}', space=vmem, size = 0xe000, scoped, tag = 'output window, operand 0']
    %7 = vsyncpa [#allocation3], 0
    %s8 = scalar_lea.sflag [#allocation3], 1
    %9 = vsyncpa %s8, 0
    %10 = vsyncpa [#allocation6], 0
    %11 = vsyncpa [#allocation4], 0
    %s12 = scalar_lea.sflag [#allocation4], 1
    %13 = vsyncpa %s12, 0
    loop: start=0, step=1, limit=4
    $region2: #{tpu_custom_call.1} parent=1 // loop_pre_header
      _
    $region3: #{tpu_custom_call.1} parent=1 // loop_header
      %s15 = sphi 0, %s19
      %p16 = scmp.ge.s32.totalorder %s15, 4
      %s25 = sphi 0, %s27
      %s28 = sphi 0, %s25
      %s29 = sphi 0, %s28
      %s45 = sphi 0, %s29
      %s49 = sphi 0, %s49
      %s51 = sphi 0, %s49
      %s52 = sphi 0, %s51
      %s66 = sphi 0, %s52
      %s72 = sphi 0, %s74
      %s75 = sphi 0, %s72
      %s76 = sphi 0, %s75
      %s92 = sphi 0, %s76
    $region4: #{tpu_custom_call.1} parent=1 // loop_header_branch
      %18 = sbr.rel (%p16) target = $region8
    $region5: #{tpu_custom_call.1} parent=1 // loop_body
      %s20 = ssub.s32 %s15, 1
      %s21 = ssub.s32 %s15, 2
      %s22 = sadd.s32 %s15, 1
      %s23 = ssub.s32 %s15, %s22
      %p24 = scmp.eq.s32.totalorder %s23, 0
      %s26 = sadd.s32 %s25, 1
      %s27 = scalar_select %p24, %s25, %s26
      %p30 = pneg %p24
      %p31 = scmp.eq.s32.totalorder %s15, 1
      %p32 = por %p30, %p31
      %p33 = scmp.ne.s32.totalorder %s25, %s28
      %p34 = scmp.eq.s32.totalorder %s15, 0
      %p35 = por %p33, %p34
      %p36 = scmp.ne.s32.totalorder %s25, %s28
      %p37 = scmp.eq.s32.totalorder %s20, 1
      %p38 = por %p36, %p37
      %p39 = scmp.ne.s32.totalorder %s28, %s29
      %p40 = scmp.eq.s32.totalorder %s20, 0
      %p41 = por %p39, %p40
      %p42 = scmp.ne.s32.totalorder %s28, %s29
      %p43 = scmp.eq.s32.totalorder %s21, 1
      %p44 = por %p42, %p43
      %p46 = scmp.ne.s32.totalorder %s29, %s45
      %p47 = scmp.eq.s32.totalorder %s21, 0
      %p48 = por %p46, %p47
      %s50 = sadd.s32 %s49, 1
      %p53 = scmp.eq.s32.totalorder %s15, 1
      %p54 = scmp.ne.s32.totalorder %s49, %s51
      %p55 = scmp.eq.s32.totalorder %s15, 0
      %p56 = por %p54, %p55
      %p57 = scmp.ne.s32.totalorder %s49, %s51
      %p58 = scmp.eq.s32.totalorder %s20, 1
      %p59 = por %p57, %p58
      %p60 = scmp.ne.s32.totalorder %s51, %s52
      %p61 = scmp.eq.s32.totalorder %s20, 0
      %p62 = por %p60, %p61
      %p63 = scmp.ne.s32.totalorder %s51, %s52
      %p64 = scmp.eq.s32.totalorder %s21, 1
      %p65 = por %p63, %p64
      %p67 = scmp.ne.s32.totalorder %s52, %s66
      %p68 = scmp.eq.s32.totalorder %s21, 0
      %p69 = por %p67, %p68
      %s70 = ssub.s32 %s15, %s22
      %p71 = scmp.eq.s32.totalorder %s70, 0
      %s73 = sadd.s32 %s72, 1
      %s74 = scalar_select %p71, %s72, %s73
      %p77 = pneg %p71
      %p78 = scmp.eq.s32.totalorder %s15, 1
      %p79 = por %p77, %p78
      %p80 = scmp.ne.s32.totalorder %s72, %s75
      %p81 = scmp.eq.s32.totalorder %s15, 0
      %p82 = por %p80, %p81
      %p83 = scmp.ne.s32.totalorder %s72, %s75
      %p84 = scmp.eq.s32.totalorder %s20, 1
      %p85 = por %p83, %p84
      %p86 = scmp.ne.s32.totalorder %s75, %s76
      %p87 = scmp.eq.s32.totalorder %s20, 0
      %p88 = por %p86, %p87
      %p89 = scmp.ne.s32.totalorder %s75, %s76
      %p90 = scmp.eq.s32.totalorder %s21, 1
      %p91 = por %p89, %p90
      %p93 = scmp.ne.s32.totalorder %s76, %s92
      %p94 = scmp.eq.s32.totalorder %s21, 0
      %p95 = por %p93, %p94
      %p96 = scmp.le.s32.totalorder 1, %s15
      %p97 = scmp.lt.s32.totalorder %s15, 3
      %p98 = pnand %p96, %p97
      %p99 = pneg %p98
      // Predicated region
      $region9: #{tpu_custom_call.1} parent=5 // pred_check
        _
      $region10: #{tpu_custom_call.1} parent=5 // pred_check_branch
        %101 = sbr.rel (%p98) target = $region12
      $region11: #{tpu_custom_call.1} parent=5 // pred_region
        %s102 = ssub.s32 %s15, 1
        // Predicated region
        $region13: #{tpu_custom_call.1} parent=11 // pred_check
          %p103 = pneg %p62
        $region14: #{tpu_custom_call.1} parent=11 // pred_check_branch
          %105 = sbr.rel (%p103) target = $region16
        $region15: #{tpu_custom_call.1} parent=11 // pred_region
          %107 = vsyncadd [#allocation6], 0
          %s109 = sshll.u32 %s1, 4
          %s110 = int_to_ptr.hbm [resolvable:$true] %s109
          %s111 = sshll.u32 [#allocation5], 4
          %s112 = int_to_ptr.vmem [resolvable:$true] %s111
          %114 = dma.hbm_to_vmem [thread:$0]  %s110, 16, %s112, [#allocation6]
        $region16: #{tpu_custom_call.1} parent=11 // pred_fallthru
          _
      $region12: #{tpu_custom_call.1} parent=5 // pred_fallthru
        _
      %p115 = scmp.lt.s32.totalorder %s15, 2
      // Predicated region
      $region17: #{tpu_custom_call.1} parent=5 // pred_check
        %p116 = pneg %p115
      $region18: #{tpu_custom_call.1} parent=5 // pred_check_branch
        %118 = sbr.rel (%p116) target = $region20
      $region19: #{tpu_custom_call.1} parent=5 // pred_region
        // Predicated region
        $region21: #{tpu_custom_call.1} parent=19 // pred_check
          %p119 = pneg %p35
        $region22: #{tpu_custom_call.1} parent=19 // pred_check_branch
          %121 = sbr.rel (%p119) target = $region24
        $region23: #{tpu_custom_call.1} parent=19 // pred_region
          %s122 = sand.u32 %s25, 1
          %s123 = scalar_lea.sflag [#allocation3], %s122
          %s124 = sand.u32 %s25, 1
          %s125 = smul.addr %s124, 48
          %s126 = scalar_lea.vmem [#allocation2], %s125
          %128 = vsyncadd %s123, 0
          %s129 = smul.addr %s15, 6
          %s130 = smul.addr %s129, 8
          %s131 = scalar_lea.hbm %s0, %s130
          %s133 = sshll.u32 %s131, 4
          %s134 = int_to_ptr.hbm [resolvable:$true] %s133
          %s135 = sshll.u32 %s126, 4
          %s136 = int_to_ptr.vmem [resolvable:$true] %s135
          %138 = dma.hbm_to_vmem [thread:$0]  %s134, 768, %s136, %s123
        $region24: #{tpu_custom_call.1} parent=19 // pred_fallthru
          _
      $region20: #{tpu_custom_call.1} parent=5 // pred_fallthru
        _
      %p139 = scmp.le.s32.totalorder 1, %s15
      %p140 = scmp.lt.s32.totalorder %s15, 3
      %p141 = pnand %p139, %p140
      %p142 = pneg %p141
      // Predicated region
      $region25: #{tpu_custom_call.1} parent=5 // pred_check
        _
      $region26: #{tpu_custom_call.1} parent=5 // pred_check_branch
        %144 = sbr.rel (%p141) target = $region28
      $region27: #{tpu_custom_call.1} parent=5 // pred_region
        %s145 = ssub.s32 %s15, 1
        %s146 = sand.u32 %s28, 1
        %s147 = scalar_lea.sflag [#allocation3], %s146
        %s148 = sand.u32 %s28, 1
        %s149 = smul.addr %s148, 48
        %s150 = scalar_lea.vmem [#allocation2], %s149
        // Predicated region
        $region29: #{tpu_custom_call.1} parent=27 // pred_check
          %p151 = pneg %p41
        $region30: #{tpu_custom_call.1} parent=27 // pred_check_branch
          %153 = sbr.rel (%p151) target = $region32
        $region31: #{tpu_custom_call.1} parent=27 // pred_region
          %155 = dma.done %s147, 768
        $region32: #{tpu_custom_call.1} parent=27 // pred_fallthru
          _
        // Predicated region
        $region33: #{tpu_custom_call.1} parent=27 // pred_check
          %p156 = pneg %p62
        $region34: #{tpu_custom_call.1} parent=27 // pred_check_branch
          %158 = sbr.rel (%p156) target = $region36
        $region35: #{tpu_custom_call.1} parent=27 // pred_region
          %160 = dma.done [#allocation6], 16
        $region36: #{tpu_custom_call.1} parent=27 // pred_fallthru
          _
        %s161 = sand.u32 %s28, 1
        %s162 = scalar_lea.sflag [#allocation3], %s161
        %s163 = sand.u32 %s28, 1
        %s164 = smul.addr %s163, 48
        %s165 = scalar_lea.vmem [#allocation2], %s164
        %p166 = pneg %p41
        %p167 = pneg %p38
        %p168 = pneg %p62
        %p169 = pneg %p59
        %p170 = pneg %p88
        %p171 = pneg %p85
        %s172 = sand.u32 %s75, 1
        %s173 = scalar_lea.sflag [#allocation4], %s172
        %s174 = sand.u32 %s75, 1
        %s175 = smul.addr %s174, 56
        %s176 = scalar_lea.vmem [#allocation7], %s175
        %v177 = vld [vmem:[%s150] sm:$0xff]
        %v178 = vld [vmem:[%s150 + $0x8] sm:$0xff]
        %v179 = vld [vmem:[%s150 + $0x10] sm:$0xff]
        %v180 = vld [vmem:[%s150 + $0x18] sm:$0xff]
        %v181 = vld [vmem:[%s150 + $0x20] sm:$0xff]
        %v182 = vld [vmem:[%s150 + $0x28] sm:$0xff]
        %183 = vst [vmem:[%s176] sm:$0xff] %v177
        %184 = vst [vmem:[%s176 + $0x8] sm:$0xff] %v178
        %185 = vst [vmem:[%s176 + $0x10] sm:$0xff] %v179
        %186 = vst [vmem:[%s176 + $0x18] sm:$0xff] %v180
        %187 = vst [vmem:[%s176 + $0x20] sm:$0xff] %v181
        %188 = vst [vmem:[%s176 + $0x28] sm:$0xff] %v182
        %v189 = vld [vmem:[#allocation5] sm:$0x1]
        %v191 = vperm.slane %v189, 0
        %vm193 = vcmask 523264
        %194 = vst.msk [vmem:[%s176 + $0x30] sm:$0xff] %vm193, %v191
        %s195 = sand.u32 %s75, 1
        %s196 = scalar_lea.sflag [#allocation4], %s195
        %s197 = sand.u32 %s75, 1
        %s198 = smul.addr %s197, 56
        %s199 = scalar_lea.vmem [#allocation7], %s198
        // Predicated region
        $region37: #{tpu_custom_call.1} parent=27 // pred_check
          %p200 = pneg %p85
        $region38: #{tpu_custom_call.1} parent=27 // pred_check_branch
          %202 = sbr.rel (%p200) target = $region40
        $region39: #{tpu_custom_call.1} parent=27 // pred_region
          %204 = vsyncadd %s196, 0
          %s205 = smul.addr %s20, 7
          %s206 = smul.addr %s205, 8
          %s207 = scalar_lea.hbm %s2, %s206
          %s209 = sshll.u32 %s199, 4
          %s210 = int_to_ptr.vmem [resolvable:$true] %s209
          %s211 = sshll.u32 %s207, 4
          %s212 = int_to_ptr.hbm [resolvable:$true] %s211
          %214 = dma.vmem_to_hbm [thread:$0]  %s210, 896, %s212, %s196
        $region40: #{tpu_custom_call.1} parent=27 // pred_fallthru
          _
      $region28: #{tpu_custom_call.1} parent=5 // pred_fallthru
        _
      %p215 = scmp.le.s32.totalorder 2, %s15
      // Predicated region
      $region41: #{tpu_custom_call.1} parent=5 // pred_check
        %p216 = pneg %p215
      $region42: #{tpu_custom_call.1} parent=5 // pred_check_branch
        %218 = sbr.rel (%p216) target = $region44
      $region43: #{tpu_custom_call.1} parent=5 // pred_region
        %s219 = ssub.s32 %s15, 2
        // Predicated region
        $region45: #{tpu_custom_call.1} parent=43 // pred_check
          %p220 = pneg %p91
        $region46: #{tpu_custom_call.1} parent=43 // pred_check_branch
          %222 = sbr.rel (%p220) target = $region48
        $region47: #{tpu_custom_call.1} parent=43 // pred_region
          %s223 = sand.u32 %s76, 1
          %s224 = scalar_lea.sflag [#allocation4], %s223
          %s225 = sand.u32 %s76, 1
          %s226 = smul.addr %s225, 56
          %s227 = scalar_lea.vmem [#allocation7], %s226
          %229 = dma.done %s224, 896
        $region48: #{tpu_custom_call.1} parent=43 // pred_fallthru
          _
      $region44: #{tpu_custom_call.1} parent=5 // pred_fallthru
        _
    $region6: #{tpu_custom_call.1} parent=1 // loop_footer
      %s19 = sadd.s32 1, %s15
    $region7: #{tpu_custom_call.1} parent=1 // loop_footer_branch
      %14 = sbr.rel target = $region3
    $region8: #{tpu_custom_call.1} parent=1 // loop_exit
      _
    %230 = vsyncpa [#allocation3], 1
    %s231 = scalar_lea.sflag [#allocation3], 1
    %232 = vsyncpa %s231, 1
    %233 = vsyncpa [#allocation6], 1
    %234 = vsyncpa [#allocation4], 1
    %s235 = scalar_lea.sflag [#allocation4], 1
    %236 = vsyncpa %s235, 1

</llo_original>
